<compile_context>
chip_gen: v5e
topology: v5e:2x2
jax: 0.10.0
libtpu: 0.0.40
codegen_flags: <defaults>
</compile_context>

<pallas_src>
import math

import jax
import jax.numpy as jnp
from jax import lax
from jax.experimental import pallas as pl
from jax.experimental.pallas import tpu as pltpu


# ----------------------------------------------------------------------------
# Per-chip VMEM budget
# ----------------------------------------------------------------------------
def _vmem_limit_bytes():
    try:
        cap = int(pltpu.get_tpu_info().vmem_capacity_bytes)
    except Exception:
        cap = 64 * 1024 * 1024          # conservative fallback (v7x-sized)
    # leave headroom for the compiler's own scratch; cap at 112 MiB
    return max(32 * 1024 * 1024, min((cap * 3) // 4, 112 * 1024 * 1024))


_VMEM_LIMIT = _vmem_limit_bytes()
_BIG_VMEM = _VMEM_LIMIT >= 80 * 1024 * 1024          # 128 MiB parts (v5e/v6e)
_LIN_TILE = 1024 if _BIG_VMEM else 512               # linear preferred tiles


def _pick_tile(dim, preferred, aligns=(256, 128, 8)):
    """Largest tile <= `preferred` that divides `dim`, preferring larger
    alignments (256 keeps v6e/v7x 2x256^2 MXU passes full).  Falls back to the
    full dim (which always satisfies the (8,128) rule)."""
    if dim <= preferred:
        return dim
    for align in aligns:
        t = (preferred // align) * align
        while t >= align:
            if dim % t == 0:
                return t
            t -= align
    # TODO(synk): pad / ragged last tile instead of one giant full-dim tile for
    # large dims with no aligned divisor (can exceed vmem_limit_bytes).
    return dim


# ----------------------------------------------------------------------------
# Tiled linear: x @ w + b with a K-reduction accumulator in VMEM
# ----------------------------------------------------------------------------
def _linear_kernel(x_ref, w_ref, b_ref, o_ref, acc_ref):
    k = pl.program_id(2)

    @pl.when(k == 0)
    def _init():
        acc_ref[...] = jnp.zeros_like(acc_ref)

    acc_ref[...] += jnp.dot(x_ref[...], w_ref[...],
                            preferred_element_type=jnp.float32)

    @pl.when(k == pl.num_programs(2) - 1)
    def _finalize():
        # Bias is added exactly once, in the K-reduction epilogue.
        o_ref[...] = (acc_ref[...] + b_ref[...].astype(jnp.float32)).astype(o_ref.dtype)


def linear_pallas(x2d, w, b, *, tm=None, tn=None, tk=None):
    """x2d: (M, K) @ w: (K, N) + b: (N,) -> (M, N), MXU matmul tiled over
    (M, N, K) with double-buffered BlockSpec pipelining."""
    M, K = x2d.shape
    Kw, N = w.shape
    assert K == Kw and b.shape == (N,)

    tm = _pick_tile(M, tm or _LIN_TILE, aligns=(8,))
    tn = _pick_tile(N, tn or _LIN_TILE)
    tk = _pick_tile(K, tk or _LIN_TILE)
    grid = (M // tm, N // tn, K // tk)

    itemsize = jnp.dtype(x2d.dtype).itemsize
    cost = pl.CostEstimate(
        flops=2 * M * N * K + M * N,
        transcendentals=0,
        bytes_accessed=(M * K + K * N + N + M * N) * itemsize,
    )

    return pl.pallas_call(
        _linear_kernel,
        out_shape=jax.ShapeDtypeStruct((M, N), x2d.dtype),
        grid=grid,
        in_specs=[
            pl.BlockSpec((tm, tk), lambda i, j, k: (i, k)),
            pl.BlockSpec((tk, tn), lambda i, j, k: (k, j)),
            pl.BlockSpec((1, tn), lambda i, j, k: (0, j)),
        ],
        out_specs=pl.BlockSpec((tm, tn), lambda i, j, k: (i, j)),
        scratch_shapes=[pltpu.VMEM((tm, tn), jnp.float32)],
        compiler_params=pltpu.CompilerParams(
            dimension_semantics=("parallel", "parallel", "arbitrary"),
            vmem_limit_bytes=_VMEM_LIMIT,
        ),
        cost_estimate=cost,
    )(x2d, w, b.reshape(1, N))


# ----------------------------------------------------------------------------
# Flash-style attention: grid (B, H, T//tq, S//tk), online softmax over S.
# Inputs are head-major (B, H, seq, D) so every block is a clean rectangular
# DMA (no per-head lane slicing / masked partial stores in the kernel).
# ----------------------------------------------------------------------------
def _flash_attn_kernel(q_ref, k_ref, v_ref, o_ref, m_ref, l_ref, acc_ref):
    # q_ref: (1,1,tq,Dq)  k_ref: (1,1,tk,Dq)  v_ref: (1,1,tk,Dv)
    # o_ref: (1,1,tq,Dv)  scratch: m/l (tq,1) f32, acc (tq,Dv) f32
    kv = pl.program_id(3)

    @pl.when(kv == 0)
    def _init():
        m_ref[...] = jnp.full_like(m_ref, -jnp.inf)
        l_ref[...] = jnp.zeros_like(l_ref)
        acc_ref[...] = jnp.zeros_like(acc_ref)

    q = q_ref[0, 0]                     # (tq, Dq) -- 1/sqrt(Dq) already in Wq
    k = k_ref[0, 0]                     # (tk, Dq)
    v = v_ref[0, 0]                     # (tk, Dv)

    # Contract the last dims directly -- no transposed copy of K.
    s = lax.dot_general(q, k, (((1,), (1,)), ((), ())),
                        preferred_element_type=jnp.float32)        # (tq, tk)

    m_prev = m_ref[...]
    m_new = jnp.maximum(m_prev, jnp.max(s, axis=-1, keepdims=True))
    alpha = jnp.exp(m_prev - m_new)
    p = jnp.exp(s - m_new)                                          # (tq, tk)
    l_ref[...] = alpha * l_ref[...] + jnp.sum(p, axis=-1, keepdims=True)
    acc_ref[...] = alpha * acc_ref[...] + jnp.dot(
        p.astype(v.dtype), v, preferred_element_type=jnp.float32)   # (tq, Dv)
    m_ref[...] = m_new

    @pl.when(kv == pl.num_programs(3) - 1)
    def _finalize():
        # Exact reciprocal: the epilogue runs once per q-tile, cost negligible.
        inv_l = pl.reciprocal(l_ref[...], approx=False)
        o_ref[0, 0] = (acc_ref[...] * inv_l).astype(o_ref.dtype)


def flash_attention_pallas(q, k, v, *, tq=256, tk=512):
    """q: (B,H,T,Dq), k: (B,H,S,Dq), v: (B,H,S,Dv) -> (B,H,T,Dv)."""
    B, H, T, Dq = q.shape
    _, _, S, Dv = v.shape
    assert k.shape == (B, H, S, Dq)

    tq = _pick_tile(T, tq, aligns=(8,))
    tk = _pick_tile(S, tk, aligns=(8,))
    grid = (B, H, T // tq, S // tk)

    itemsize = jnp.dtype(q.dtype).itemsize
    n_qtiles = T // tq
    cost = pl.CostEstimate(
        flops=2 * B * H * T * S * (Dq + Dv),
        transcendentals=B * H * T * S,
        bytes_accessed=(B * H * (T * Dq + n_qtiles * S * (Dq + Dv) + T * Dv))
        * itemsize,
    )

    return pl.pallas_call(
        _flash_attn_kernel,
        out_shape=jax.ShapeDtypeStruct((B, H, T, Dv), q.dtype),
        grid=grid,
        in_specs=[
            pl.BlockSpec((1, 1, tq, Dq), lambda b, h, i, j: (b, h, i, 0)),
            pl.BlockSpec((1, 1, tk, Dq), lambda b, h, i, j: (b, h, j, 0)),
            pl.BlockSpec((1, 1, tk, Dv), lambda b, h, i, j: (b, h, j, 0)),
        ],
        out_specs=pl.BlockSpec((1, 1, tq, Dv), lambda b, h, i, j: (b, h, i, 0)),
        scratch_shapes=[
            pltpu.VMEM((tq, 1), jnp.float32),    # running max m
            pltpu.VMEM((tq, 1), jnp.float32),    # running denom l
            pltpu.VMEM((tq, Dv), jnp.float32),   # running numerator
        ],
        compiler_params=pltpu.CompilerParams(
            dimension_semantics=("parallel", "parallel", "parallel", "arbitrary"),
            vmem_limit_bytes=_VMEM_LIMIT,
        ),
        cost_estimate=cost,
    )(q, k, v)


# ----------------------------------------------------------------------------
# Module wrapper
# ----------------------------------------------------------------------------
def init_mha_params(key, emb_dim, attn_dim, v_dim, num_heads, dtype=jnp.float32):
    """Deterministic init matching nn.Linear default (U(-1/sqrt(fan_in), +))."""
    in_dim = emb_dim * num_heads
    qk_out = attn_dim * num_heads
    v_out = v_dim * num_heads

    def make_linear(k_, fan_in, fan_out):
        kw, kb = jax.random.split(k_)
        bound = 1.0 / math.sqrt(fan_in)
        w = jax.random.uniform(kw, (fan_in, fan_out), dtype, -bound, bound)
        b = jax.random.uniform(kb, (fan_out,), dtype, -bound, bound)
        return w, b

    kq, kk, kv, ko = jax.random.split(key, 4)
    wq, bq = make_linear(kq, in_dim, qk_out)
    wk, bk = make_linear(kk, in_dim, qk_out)
    wv, bv = make_linear(kv, in_dim, v_out)
    wo, bo = make_linear(ko, in_dim, v_out)   # __init__: Linear(emb*H, v*H)

    # One-time parameter transforms (not per-forward work):
    #  * fold 1/sqrt(attn_dim) into the Q projection,
    #  * fuse K|V weights so x is projected with a single matmul.
    scale = 1.0 / math.sqrt(float(attn_dim))
    wq_s, bq_s = wq * scale, bq * scale
    wkv = jnp.concatenate([wk, wv], axis=1)
    bkv = jnp.concatenate([bk, bv], axis=0)
    return dict(wq=wq, bq=bq, wk=wk, bk=bk, wv=wv, bv=bv, wo=wo, bo=bo,
                wq_s=wq_s, bq_s=bq_s, wkv=wkv, bkv=bkv)


def mha_forward(params, x, y, *, attn_dim, v_dim, num_heads, compute_dtype=None):
    """x: (B, S, emb*H) keys/values source, y: (B, T, emb*H) query source."""
    if compute_dtype is not None:
        # bf16 path: halves HBM/VMEM traffic and doubles MXU throughput on
        # v6e/v7x; accumulation and softmax stay f32 inside the kernels.
        x = x.astype(compute_dtype)
        y = y.astype(compute_dtype)
        params = jax.tree_util.tree_map(lambda p: p.astype(compute_dtype), params)

    b, s, in_dim = x.shape
    _, t, _ = y.shape
    H = num_heads
    qd, vd = H * attn_dim, H * v_dim

    # Q projection on y (scale pre-folded); fused K|V projection on x.
    q2d = linear_pallas(y.reshape(b * t, in_dim), params["wq_s"], params["bq_s"])
    kv2d = linear_pallas(x.reshape(b * s, in_dim), params["wkv"], params["bkv"])

    # Head-major layout so each attention block is a clean rectangular DMA on
    # tile boundaries (no per-head lane slicing inside the kernel).
    q4 = q2d.reshape(b, t, H, attn_dim).transpose(0, 2, 1, 3)          # (B,H,T,Dq)
    k4 = kv2d[:, :qd].reshape(b, s, H, attn_dim).transpose(0, 2, 1, 3)  # (B,H,S,Dq)
    v4 = kv2d[:, qd:].reshape(b, s, H, v_dim).transpose(0, 2, 1, 3)     # (B,H,S,Dv)

    ctx4 = flash_attention_pallas(q4, k4, v4)                           # (B,H,T,Dv)
    ctx = ctx4.transpose(0, 2, 1, 3).reshape(b * t, vd)

    o = linear_pallas(ctx, params["wo"], params["bo"])
    return o.reshape(b, t, vd)


def mha_reference(params, x, y, *, attn_dim, v_dim, num_heads):
    """Pure-JAX reference for verification (uses unscaled Wq + explicit scale)."""
    b, s, _ = x.shape
    _, t, _ = y.shape
    H = num_heads
    q = (y @ params["wq"] + params["bq"]).reshape(b, t, H, attn_dim).transpose(0, 2, 1, 3)
    k = (x @ params["wk"] + params["bk"]).reshape(b, s, H, attn_dim).transpose(0, 2, 1, 3)
    v = (x @ params["wv"] + params["bv"]).reshape(b, s, H, v_dim).transpose(0, 2, 1, 3)
    logits = jnp.einsum("bhtd,bhsd->bhts", q, k) / math.sqrt(float(attn_dim))
    attn = jax.nn.softmax(logits, axis=-1)
    ctx = jnp.einsum("bhts,bhsd->bhtd", attn, v).transpose(0, 2, 1, 3).reshape(b, t, H * v_dim)
    return ctx @ params["wo"] + params["bo"]


if __name__ == "__main__":
    # Small shapes; emb_dim == v_dim so the __init__ linear shape is consistent.
    emb_dim, attn_dim, v_dim, num_heads = 16, 16, 16, 2
    hidden = emb_dim * num_heads  # 32

    key = jax.random.PRNGKey(0)
    kp, kx, ky, kx2, ky2 = jax.random.split(key, 5)
    params = init_mha_params(kp, emb_dim, attn_dim, v_dim, num_heads)

    # --- small demo (b=2, s=t=8, hidden=32), f32 ---------------------------
    b, s, t = 2, 8, 8
    x = jax.random.normal(kx, (b, s, hidden), jnp.float32)
    y = jax.random.normal(ky, (b, t, hidden), jnp.float32)

    out = mha_forward(params, x, y, attn_dim=attn_dim, v_dim=v_dim,
                      num_heads=num_heads)
    out = jax.block_until_ready(out)
    ref = mha_reference(params, x, y, attn_dim=attn_dim, v_dim=v_dim,
                        num_heads=num_heads)
    assert out.shape == (b, t, v_dim * num_heads), out.shape
    assert jnp.allclose(out, ref, atol=2e-3, rtol=2e-3), "f32 small mismatch"

    # --- bf16 MXU path (same shapes, looser tolerance) ---------------------
    out_bf16 = mha_forward(params, x, y, attn_dim=attn_dim, v_dim=v_dim,
                           num_heads=num_heads, compute_dtype=jnp.bfloat16)
    out_bf16 = jax.block_until_ready(out_bf16)
    assert jnp.allclose(out_bf16.astype(jnp.float32), ref, atol=1e-1, rtol=1e-1), \
        "bf16 mismatch"

    # --- longer sequences: exercises the tiled query axis and the online-
    #     softmax KV loop (multiple KV tiles), f32 ---------------------------
    s2 = t2 = 1024
    x2 = jax.random.normal(kx2, (b, s2, hidden), jnp.float32)
    y2 = jax.random.normal(ky2, (b, t2, hidden), jnp.float32)
    out2 = mha_forward(params, x2, y2, attn_dim=attn_dim, v_dim=v_dim,
                       num_heads=num_heads)
    out2 = jax.block_until_ready(out2)
    ref2 = mha_reference(params, x2, y2, attn_dim=attn_dim, v_dim=v_dim,
                         num_heads=num_heads)
    assert out2.shape == (b, t2, v_dim * num_heads), out2.shape
    assert jnp.allclose(out2, ref2, atol=2e-3, rtol=2e-3), "f32 long mismatch"

    print("KERNEL_OK")
</pallas_src>

<mosaic_0001>
module attributes {stable_mosaic.version = 11 : i64} {
  func.func @_linear_kernel(%arg0: i32, %arg1: i32, %arg2: i32, %arg3: memref<16x32xf32, #tpu.memory_space<vmem>>, %arg4: memref<32x32xf32, #tpu.memory_space<vmem>>, %arg5: memref<1x32xf32, #tpu.memory_space<vmem>>, %arg6: memref<16x32xf32, #tpu.memory_space<vmem>>, %arg7: memref<16x32xf32, #tpu.memory_space<vmem>>) attributes {dimension_semantics = [#tpu.dimension_semantics<parallel>, #tpu.dimension_semantics<parallel>, #tpu.dimension_semantics<arbitrary>], iteration_bounds = array<i64: 1, 1, 1>, scalar_prefetch = 0 : i64, scratch_operands = 1 : i64, tpu.core_type = #tpu.core_type<tc>, window_params = [{transform_indices = @transform_0, window_bounds = array<i64: 16, 32>}, {transform_indices = @transform_1, window_bounds = array<i64: 32, 32>}, {transform_indices = @transform_2, window_bounds = array<i64: 1, 32>}, {transform_indices = @transform_3, window_bounds = array<i64: 16, 32>}]} {
    %c0_i32 = arith.constant 0 : i32
    %0 = arith.cmpi eq, %arg2, %c0_i32 : i32
    %1 = arith.extui %0 : i1 to i32
    %c0_i32_0 = arith.constant 0 : i32
    %2 = arith.cmpi ne, %1, %c0_i32_0 : i32
    scf.if %2 {
      %cst_10 = arith.constant 0.000000e+00 : f32
      %12 = vector.broadcast %cst_10 : f32 to vector<16x32xf32>
      %c0_11 = arith.constant 0 : index
      %c0_12 = arith.constant 0 : index
      %13 = vector.load %arg7[%c0_11, %c0_12] : memref<16x32xf32, #tpu.memory_space<vmem>>, vector<16x32xf32>
      tpu.vector_store %arg7[%c0_11, %c0_12], %12 {strides = array<i32>} : memref<16x32xf32, #tpu.memory_space<vmem>>, vector<16x32xf32>,
    } else {
    }
    %c0 = arith.constant 0 : index
    %c0_1 = arith.constant 0 : index
    %3 = vector.load %arg7[%c0, %c0_1] : memref<16x32xf32, #tpu.memory_space<vmem>>, vector<16x32xf32>
    %c0_2 = arith.constant 0 : index
    %c0_3 = arith.constant 0 : index
    %4 = vector.load %arg3[%c0_2, %c0_3] : memref<16x32xf32, #tpu.memory_space<vmem>>, vector<16x32xf32>
    %c0_4 = arith.constant 0 : index
    %c0_5 = arith.constant 0 : index
    %5 = vector.load %arg4[%c0_4, %c0_5] : memref<32x32xf32, #tpu.memory_space<vmem>>, vector<32x32xf32>
    %cst = arith.constant dense<0.000000e+00> : vector<16x32xf32>
    %6 = tpu.matmul %4, %5, %cst {dimension_numbers = #tpu.dot_dimension_numbers<[1], [0], [0], [1], [0, 0, 1, 1], [], []>} : vector<16x32xf32>, vector<32x32xf32>, vector<16x32xf32> -> vector<16x32xf32>
    %7 = arith.addf %3, %6 : vector<16x32xf32>
    %c0_6 = arith.constant 0 : index
    %c0_7 = arith.constant 0 : index
    %8 = vector.load %arg7[%c0_6, %c0_7] : memref<16x32xf32, #tpu.memory_space<vmem>>, vector<16x32xf32>
    tpu.vector_store %arg7[%c0_6, %c0_7], %7 {strides = array<i32>} : memref<16x32xf32, #tpu.memory_space<vmem>>, vector<16x32xf32>,
    %c0_i32_8 = arith.constant 0 : i32
    %9 = arith.cmpi eq, %arg2, %c0_i32_8 : i32
    %10 = arith.extui %9 : i1 to i32
    %c0_i32_9 = arith.constant 0 : i32
    %11 = arith.cmpi ne, %10, %c0_i32_9 : i32
    scf.if %11 {
      %c0_10 = arith.constant 0 : index
      %c0_11 = arith.constant 0 : index
      %12 = vector.load %arg7[%c0_10, %c0_11] : memref<16x32xf32, #tpu.memory_space<vmem>>, vector<16x32xf32>
      %c0_12 = arith.constant 0 : index
      %c0_13 = arith.constant 0 : index
      %13 = vector.load %arg5[%c0_12, %c0_13] : memref<1x32xf32, #tpu.memory_space<vmem>>, vector<1x32xf32>
      %14 = vector.broadcast %13 : vector<1x32xf32> to vector<16x32xf32>
      %15 = arith.addf %12, %14 : vector<16x32xf32>
      %c0_14 = arith.constant 0 : index
      %c0_15 = arith.constant 0 : index
      %16 = vector.load %arg6[%c0_14, %c0_15] : memref<16x32xf32, #tpu.memory_space<vmem>>, vector<16x32xf32>
      tpu.vector_store %arg6[%c0_14, %c0_15], %15 {strides = array<i32>} : memref<16x32xf32, #tpu.memory_space<vmem>>, vector<16x32xf32>,
    } else {
    }
    return
  }
  func.func @transform_0(%arg0: i32, %arg1: i32, %arg2: i32) -> (i32, i32) {
    %c0_i32 = arith.constant 0 : i32
    return %arg0, %arg2 : i32, i32
  }
  func.func @transform_1(%arg0: i32, %arg1: i32, %arg2: i32) -> (i32, i32) {
    %c0_i32 = arith.constant 0 : i32
    return %arg2, %arg1 : i32, i32
  }
  func.func @transform_2(%arg0: i32, %arg1: i32, %arg2: i32) -> (i32, i32) {
    %c0_i32 = arith.constant 0 : i32
    %c0_i32_0 = arith.constant 0 : i32
    return %c0_i32, %arg1 : i32, i32
  }
  func.func @transform_3(%arg0: i32, %arg1: i32, %arg2: i32) -> (i32, i32) {
    %c0_i32 = arith.constant 0 : i32
    return %arg0, %arg1 : i32, i32
  }
}

</mosaic_0001>

<llo_original>
// kernel: tpu_custom_call.1
$region0: #{tpu_custom_call.1}
  #allocation0 [shape = 'u32[]', space=smem, size = 0x4, offset = 0x4, fixed_abs, tag = 'smem constant byte address 0x4 - core index']
  #allocation1 [shape = 'u32[72,128]{1,0:T(1,128)}', space=vmem, size = 0x9000, scoped, tag = 'internal scratch']
  #allocation2 [shape = 'f32[16,32]{1,0:T(8,128)}', space=vmem, size = 0x2000, scoped, tag = 'scratch operand']
  %s0 = inlined_call_operand.hbm [shape: f32[16,32], index: 0, kind: input, shape index: {}]
  %s1 = inlined_call_operand.hbm [shape: f32[32,32], index: 1, kind: input, shape index: {}]
  %s2 = inlined_call_operand.vmem [shape: f32[1,32], index: 2, kind: input, shape index: {}]
  %s3 = inlined_call_operand.hbm [shape: f32[16,32], index: 3, kind: output, shape index: {}]
  %s4 = sld [smem:[#allocation0]]
  $region38: #{tpu_custom_call.1} parent=0
    _
  %s6 = ssub.s32 1, %s4
  %s7 = scalar_select 0, %s6, %s4
  $region1: #{tpu_custom_call.1} parent=0
    #allocation3 [shape = 'u8[8192]{0}', space=vmem, size = 0x2000, scoped, tag = 'input window, operand 0, single buffered']
    #allocation4 [shape = 's32[1]{0}', space=sflag, size = 0x4, scoped, tag = 'scoped memory for tpu_custom_call.1']
    #allocation5 [shape = 's32[1]{0}', space=sflag, size = 0x4, scoped, tag = 'scoped memory for tpu_custom_call.1']
    #allocation6 [shape = 'u8[16384]{0}', space=vmem, size = 0x4000, scoped, tag = 'input window, operand 1, single buffered']
    #allocation7 [shape = 's32[1]{0}', space=sflag, size = 0x4, scoped, tag = 'scoped memory for tpu_custom_call.1']
    #allocation8 [shape = 'u8[8192]{0}', space=vmem, size = 0x2000, scoped, tag = 'output window, operand 0, single buffered']
    %8 = vsyncpa [#allocation4], 0
    %9 = vsyncpa [#allocation7], 0
    %10 = vsyncpa [#allocation5], 0
    // Predicated region
    $region2: #{tpu_custom_call.1} parent=1 // pred_check
      _
    $region3: #{tpu_custom_call.1} parent=1 // pred_check_branch
      %12 = sbr.rel (0) target = $region5
    $region4: #{tpu_custom_call.1} parent=1 // pred_region
      %14 = vsyncadd [#allocation4], 0
      %s15 = sshll.u32 %s0, 4
      %s16 = int_to_ptr.hbm [resolvable:$true] %s15
      %s17 = sshll.u32 [#allocation3], 4
      %s18 = int_to_ptr.vmem [resolvable:$true] %s17
      %23 = dma.hbm_to_vmem [thread:$0]  %s16, 256, %s18, [#allocation4], 128, 128, 8
    $region5: #{tpu_custom_call.1} parent=1 // pred_fallthru
      _
    // Predicated region
    $region6: #{tpu_custom_call.1} parent=1 // pred_check
      _
    $region7: #{tpu_custom_call.1} parent=1 // pred_check_branch
      %25 = sbr.rel (0) target = $region9
    $region8: #{tpu_custom_call.1} parent=1 // pred_region
      %27 = vsyncadd [#allocation7], 0
      %s28 = sshll.u32 %s1, 4
      %s29 = int_to_ptr.hbm [resolvable:$true] %s28
      %s30 = sshll.u32 [#allocation6], 4
      %s31 = int_to_ptr.vmem [resolvable:$true] %s30
      %36 = dma.hbm_to_vmem [thread:$0]  %s29, 512, %s31, [#allocation7], 128, 128, 8
    $region9: #{tpu_custom_call.1} parent=1 // pred_fallthru
      _
    // Predicated region
    $region10: #{tpu_custom_call.1} parent=1 // pred_check
      _
    $region11: #{tpu_custom_call.1} parent=1 // pred_check_branch
      %38 = sbr.rel (0) target = $region13
    $region12: #{tpu_custom_call.1} parent=1 // pred_region
      _
    $region13: #{tpu_custom_call.1} parent=1 // pred_fallthru
      _
    // Predicated region
    $region14: #{tpu_custom_call.1} parent=1 // pred_check
      _
    $region15: #{tpu_custom_call.1} parent=1 // pred_check_branch
      %40 = sbr.rel (0) target = $region17
    $region16: #{tpu_custom_call.1} parent=1 // pred_region
      %42 = dma.done [#allocation4], 256
    $region17: #{tpu_custom_call.1} parent=1 // pred_fallthru
      _
    // Predicated region
    $region18: #{tpu_custom_call.1} parent=1 // pred_check
      _
    $region19: #{tpu_custom_call.1} parent=1 // pred_check_branch
      %44 = sbr.rel (0) target = $region21
    $region20: #{tpu_custom_call.1} parent=1 // pred_region
      %46 = dma.done [#allocation7], 512
    $region21: #{tpu_custom_call.1} parent=1 // pred_fallthru
      _
    %p47 = scmp.eq.s32.totalorder 0, 0
    // Predicated region
    $region22: #{tpu_custom_call.1} parent=1 // pred_check
      %p48 = pneg %p47
    $region23: #{tpu_custom_call.1} parent=1 // pred_check_branch
      %50 = sbr.rel (%p48) target = $region25
    $region24: #{tpu_custom_call.1} parent=1 // pred_region
      %vm51 = vcmask 261120
      %52 = vst.msk [vmem:[#allocation2] sm:$0xff] %vm51, 0.0
      %53 = vst.msk [vmem:[#allocation2 + $0x8] sm:$0xff] %vm51, 0.0
    $region25: #{tpu_custom_call.1} parent=1 // pred_fallthru
      _
    %v54 = vld [vmem:[#allocation2] sm:$0xff]
    %v55 = vld [vmem:[#allocation2 + $0x8] sm:$0xff]
    %v56 = vld [vmem:[#allocation3] sm:$0xff]
    %v57 = vld [vmem:[#allocation3 + $0x8] sm:$0xff]
    %v58 = vld [vmem:[#allocation6] sm:$0xff]
    %v59 = vld [vmem:[#allocation6 + $0x8] sm:$0xff]
    %v60 = vld [vmem:[#allocation6 + $0x10] sm:$0xff]
    %v61 = vld [vmem:[#allocation6 + $0x18] sm:$0xff]
    %vm62 = vcmask 261120
    %v64 = vsel %vm62, %v56, 0
    %v67 = vsel %vm62, %v57, 0
    %69 = vmatpush.msra.mxu0 0.0
    %70 = vmatpush.msra.mxu0 0.0
    %71 = vmatpush.msra.mxu0 0.0
    %72 = vmatpush.msra.mxu0 0.0
    %73 = vmatpush.msra.mxu0 0.0
    %74 = vmatpush.msra.mxu0 0.0
    %75 = vmatpush.msra.mxu0 0.0
    %76 = vmatpush.msra.mxu0 0.0
    %77 = vmatpush.msra.mxu0 0.0
    %78 = vmatpush.msra.mxu0 0.0
    %79 = vmatpush.msra.mxu0 0.0
    %80 = vmatpush.msra.mxu0 0.0
    %81 = vmatpush.msra.mxu0 %v61
    %82 = vmatpush.msra.mxu0 %v60
    %83 = vmatpush.msra.mxu0 %v59
    %84 = vmatpush.msra.mxu0 %v58
    %85 = vmatmul.f32.gmra.mxu0 %v64
    %v86 = vpop.f32.mrf.mxu0
    %v87 = vadd.f32 0.0, %v86
    %88 = vmatmul.f32.gmra.mxu0 %v67
    %v89 = vpop.f32.mrf.mxu0
    %v90 = vadd.f32 0.0, %v89
    %91 = vdwg.mxu0
    %v92 = vadd.f32 %v54, %v87
    %v93 = vadd.f32 %v55, %v90
    %94 = vst.msk [vmem:[#allocation2] sm:$0xff] %vm62, %v92
    %95 = vst.msk [vmem:[#allocation2 + $0x8] sm:$0xff] %vm62, %v93
    // Predicated region
    $region26: #{tpu_custom_call.1} parent=1 // pred_check
      %p96 = pneg %p47
    $region27: #{tpu_custom_call.1} parent=1 // pred_check_branch
      %98 = sbr.rel (%p96) target = $region29
    $region28: #{tpu_custom_call.1} parent=1 // pred_region
      %v99 = vld [vmem:[#allocation2] sm:$0xff]
      %v100 = vld [vmem:[#allocation2 + $0x8] sm:$0xff]
      %v101 = vld [vmem:[%s2] sm:$0x1]
      %v103 = vperm.slane %v101, 0
      %v105 = vadd.f32 %v99, %v103
      %v106 = vadd.f32 %v100, %v103
      %107 = vst.msk [vmem:[#allocation8] sm:$0xff] %vm62, %v105
      %108 = vst.msk [vmem:[#allocation8 + $0x8] sm:$0xff] %vm62, %v106
    $region29: #{tpu_custom_call.1} parent=1 // pred_fallthru
      _
    // Predicated region
    $region30: #{tpu_custom_call.1} parent=1 // pred_check
      _
    $region31: #{tpu_custom_call.1} parent=1 // pred_check_branch
      %110 = sbr.rel (0) target = $region33
    $region32: #{tpu_custom_call.1} parent=1 // pred_region
      %112 = vsyncadd [#allocation5], 0
      %s113 = sshll.u32 [#allocation8], 4
      %s114 = int_to_ptr.vmem [resolvable:$true] %s113
      %s115 = sshll.u32 %s3, 4
      %s116 = int_to_ptr.hbm [resolvable:$true] %s115
      %121 = dma.vmem_to_hbm [thread:$0]  %s114, 256, %s116, [#allocation5], 128, 128, 8
    $region33: #{tpu_custom_call.1} parent=1 // pred_fallthru
      _
    // Predicated region
    $region34: #{tpu_custom_call.1} parent=1 // pred_check
      _
    $region35: #{tpu_custom_call.1} parent=1 // pred_check_branch
      %123 = sbr.rel (0) target = $region37
    $region36: #{tpu_custom_call.1} parent=1 // pred_region
      %125 = dma.done [#allocation5], 256
    $region37: #{tpu_custom_call.1} parent=1 // pred_fallthru
      _
    %126 = vsyncpa [#allocation4], 1
    %127 = vsyncpa [#allocation7], 1
    %128 = vsyncpa [#allocation5], 1

</llo_original>
